<compile_context>
chip_gen: v7x
topology: tpu7x:2x2x1
jax: 0.10.0
libtpu: 0.0.40
codegen_flags: <defaults>
</compile_context>

<pallas_src>
from functools import partial

import numpy as np
import jax
import jax.numpy as jnp
from jax.experimental import pallas as pl
from jax.experimental.pallas import tpu as pltpu

MAX_PATH_DISTANCE = 5

# VMEM budget for the pipelined working set:
#   2 buffers x (tm*tn int8 in + tm*tn f32 out) = 10 * tm * tn bytes.
# Keep under ~12 MiB so it fits v5e's 16 MiB scoped default without having to
# raise vmem_limit_bytes (also well inside v6e/v7x scoped limits).
_VMEM_BUDGET_BYTES = 12 * 1024 * 1024
_TN_MAX = 4096   # lane-axis cap, multiple of 128 -> unmasked lane-dense vst
_TM_MAX = 512    # sublane-axis cap, multiple of 32 (int8 sublane packing)


def _round_up(x: int, m: int) -> int:
    return (x + m - 1) // m * m


def _spatial_encoding_kernel(b_ref, len_ref, out_ref, *, max_path_distance):
    # len_ref: (TM, TN) int8 path lengths (0 == "no path" -> output stays 0,
    # matching the torch.zeros init).  The clamp to max_path_distance is
    # folded into the last `>=` branch, so it is correct even for raw,
    # un-clamped length matrices.
    L = len_ref[...].astype(jnp.int32)

    # Hoist the SMEM scalar reads of b out of the compare/select chain.
    b_vals = [b_ref[k] for k in range(max_path_distance)]

    acc = jnp.zeros(out_ref.shape, jnp.float32)
    for k in range(max_path_distance - 1):
        acc = jnp.where(L == (k + 1), b_vals[k], acc)
    acc = jnp.where(L >= max_path_distance, b_vals[max_path_distance - 1], acc)
    out_ref[...] = acc


def _pick_tiles(n: int) -> tuple[int, int]:
    """Choose (tm, tn): full-row-ish lane tiles, VMEM-budgeted sublane tiles."""
    tn = min(_round_up(n, 128), _TN_MAX)
    tm = (_VMEM_BUDGET_BYTES // (10 * tn)) // 32 * 32
    tm = max(32, min(tm, _TM_MAX))
    # Split the row axis into >= 2 blocks for modest N so both v7x TensorCores
    # get work (grid axes are marked "parallel").
    tm = min(tm, max(32, _round_up(-(-n // 2), 32)))
    return tm, tn


def spatial_encoding(b: jax.Array, path_lengths: jax.Array,
                     max_path_distance: int) -> jax.Array:
    """b: (max_path_distance,) f32; path_lengths: (N, N) int8/int (0 = no path)."""
    n = path_lengths.shape[0]
    tm, tn = _pick_tiles(n)
    grid = (pl.cdiv(n, tm), pl.cdiv(n, tn))

    kernel = partial(_spatial_encoding_kernel,
                     max_path_distance=max_path_distance)
    return pl.pallas_call(
        kernel,
        out_shape=jax.ShapeDtypeStruct((n, n), jnp.float32),
        grid=grid,
        in_specs=[
            # Tiny bias vector lives in SMEM, read as scalars.
            pl.BlockSpec(memory_space=pltpu.MemorySpace.SMEM),
            # Path-length tiles, double-buffered by the Pallas pipeline.
            # Ragged edge blocks are masked by Pallas; edge lanes hold
            # undefined input data but their output lanes are never stored.
            pl.BlockSpec((tm, tn), lambda i, j: (i, j)),
        ],
        out_specs=pl.BlockSpec((tm, tn), lambda i, j: (i, j)),
        compiler_params=pltpu.CompilerParams(
            dimension_semantics=("parallel", "parallel")),
        cost_estimate=pl.CostEstimate(
            flops=10 * n * n, transcendentals=0, bytes_accessed=5 * n * n),
    )(b, path_lengths)


def paths_to_length_matrix(paths, num_nodes: int,
                           max_path_distance: int) -> np.ndarray:
    """Densify dict-of-dicts paths into a clamped int8 (N, N) length matrix.

    0 encodes "no path".  Clamp happens BEFORE the int8 cast so raw lengths
    > 127 cannot wrap/negate.
    """
    lengths = np.zeros((num_nodes, num_nodes), dtype=np.int32)
    for src in paths:
        for dst in paths[src]:
            lengths[src, dst] = len(paths[src][dst])
    return np.minimum(lengths, max_path_distance).astype(np.int8)


def reference_spatial_encoding(paths, b_np: np.ndarray, num_nodes: int,
                               max_path_distance: int) -> np.ndarray:
    """Direct transcription of the PyTorch forward (for verification)."""
    out = np.zeros((num_nodes, num_nodes), dtype=np.float32)
    for src in paths:
        for dst in paths[src]:
            out[src, dst] = b_np[min(len(paths[src][dst]), max_path_distance) - 1]
    return out


def build_example_paths(num_nodes: int):
    """Deterministic synthetic pairwise node paths (dict[src][dst] = node list)."""
    paths = {}
    for src in range(num_nodes):
        paths[src] = {}
        for dst in range(num_nodes):
            if src == dst:
                continue
            if (src + dst) % 3 == 0:
                continue  # some pairs have no path
            plen = abs(src - dst)  # path of length |src - dst| >= 1
            paths[src][dst] = list(range(plen))
    return paths


def _run_check(num_nodes: int, hidden: int, key) -> None:
    k_b, k_x = jax.random.split(key)
    b = jax.random.normal(k_b, (MAX_PATH_DISTANCE,), dtype=jnp.float32)
    # Node feature matrix x — only its shape[0] (number of nodes) is used.
    x = jax.random.normal(k_x, (num_nodes, hidden), dtype=jnp.float32)

    paths = build_example_paths(num_nodes)
    path_len = jnp.asarray(
        paths_to_length_matrix(paths, x.shape[0], MAX_PATH_DISTANCE))

    out = spatial_encoding(b, path_len, MAX_PATH_DISTANCE)
    out = jax.block_until_ready(out)

    ref = reference_spatial_encoding(paths, np.asarray(b), x.shape[0],
                                     MAX_PATH_DISTANCE)
    np.testing.assert_allclose(np.asarray(out), ref, rtol=1e-6, atol=1e-6)


if __name__ == "__main__":
    key = jax.random.PRNGKey(0)
    k0, k1, k2 = jax.random.split(key, 3)

    # Small shape consistent with the module spec.
    _run_check(num_nodes=8, hidden=16, key=k0)
    # Ragged sublane edge (grid rows = 2, second block masked).
    _run_check(num_nodes=96, hidden=16, key=k1)
    # Ragged lane edge (N not a multiple of 128).
    _run_check(num_nodes=200, hidden=16, key=k2)

    print("KERNEL_OK")
</pallas_src>

<mosaic_0001>
module attributes {stable_mosaic.version = 11 : i64} {
  func.func @_spatial_encoding_kernel(%arg0: i32, %arg1: i32, %arg2: memref<5xf32, #tpu.memory_space<smem>>, %arg3: memref<32x128xi8, #tpu.memory_space<vmem>>, %arg4: memref<32x128xf32, #tpu.memory_space<vmem>>) attributes {dimension_semantics = [#tpu.dimension_semantics<parallel>, #tpu.dimension_semantics<parallel>], iteration_bounds = array<i64: 1, 1>, scalar_prefetch = 0 : i64, scratch_operands = 0 : i64, tpu.core_type = #tpu.core_type<tc>, window_params = [{transform_indices = @transform_0, window_bounds = array<i64: 5>}, {transform_indices = @transform_1, window_bounds = array<i64: 32, 128>}, {transform_indices = @transform_2, window_bounds = array<i64: 32, 128>}]} {
    %c0 = arith.constant 0 : index
    %c0_0 = arith.constant 0 : index
    %0 = vector.load %arg3[%c0, %c0_0] : memref<32x128xi8, #tpu.memory_space<vmem>>, vector<32x128xi8>
    %1 = arith.extsi %0 : vector<32x128xi8> to vector<32x128xi32>
    %c0_1 = arith.constant 0 : index
    %2 = memref.load %arg2[%c0_1] : memref<5xf32, #tpu.memory_space<smem>>
    %c1 = arith.constant 1 : index
    %3 = memref.load %arg2[%c1] : memref<5xf32, #tpu.memory_space<smem>>
    %c2 = arith.constant 2 : index
    %4 = memref.load %arg2[%c2] : memref<5xf32, #tpu.memory_space<smem>>
    %c3 = arith.constant 3 : index
    %5 = memref.load %arg2[%c3] : memref<5xf32, #tpu.memory_space<smem>>
    %c4 = arith.constant 4 : index
    %6 = memref.load %arg2[%c4] : memref<5xf32, #tpu.memory_space<smem>>
    %cst = arith.constant 0.000000e+00 : f32
    %7 = vector.broadcast %cst : f32 to vector<32x128xf32>
    %c1_i32 = arith.constant 1 : i32
    %8 = vector.broadcast %c1_i32 : i32 to vector<32x128xi32>
    %9 = arith.cmpi eq, %1, %8 : vector<32x128xi32>
    %10 = vector.broadcast %2 : f32 to vector<32x128xf32>
    %11 = arith.select %9, %10, %7 : vector<32x128xi1>, vector<32x128xf32>
    %c2_i32 = arith.constant 2 : i32
    %12 = vector.broadcast %c2_i32 : i32 to vector<32x128xi32>
    %13 = arith.cmpi eq, %1, %12 : vector<32x128xi32>
    %14 = vector.broadcast %3 : f32 to vector<32x128xf32>
    %15 = arith.select %13, %14, %11 : vector<32x128xi1>, vector<32x128xf32>
    %c3_i32 = arith.constant 3 : i32
    %16 = vector.broadcast %c3_i32 : i32 to vector<32x128xi32>
    %17 = arith.cmpi eq, %1, %16 : vector<32x128xi32>
    %18 = vector.broadcast %4 : f32 to vector<32x128xf32>
    %19 = arith.select %17, %18, %15 : vector<32x128xi1>, vector<32x128xf32>
    %c4_i32 = arith.constant 4 : i32
    %20 = vector.broadcast %c4_i32 : i32 to vector<32x128xi32>
    %21 = arith.cmpi eq, %1, %20 : vector<32x128xi32>
    %22 = vector.broadcast %5 : f32 to vector<32x128xf32>
    %23 = arith.select %21, %22, %19 : vector<32x128xi1>, vector<32x128xf32>
    %c5_i32 = arith.constant 5 : i32
    %24 = vector.broadcast %c5_i32 : i32 to vector<32x128xi32>
    %25 = arith.cmpi sge, %1, %24 : vector<32x128xi32>
    %26 = vector.broadcast %6 : f32 to vector<32x128xf32>
    %27 = arith.select %25, %26, %23 : vector<32x128xi1>, vector<32x128xf32>
    %c0_2 = arith.constant 0 : index
    %c0_3 = arith.constant 0 : index
    %28 = vector.load %arg4[%c0_2, %c0_3] : memref<32x128xf32, #tpu.memory_space<vmem>>, vector<32x128xf32>
    tpu.vector_store %arg4[%c0_2, %c0_3], %27 {strides = array<i32>} : memref<32x128xf32, #tpu.memory_space<vmem>>, vector<32x128xf32>,
    return
  }
  func.func @transform_0(%arg0: i32, %arg1: i32) -> i32 {
    %c0_i32 = arith.constant 0 : i32
    %c0_i32_0 = arith.constant 0 : i32
    return %c0_i32 : i32
  }
  func.func @transform_1(%arg0: i32, %arg1: i32) -> (i32, i32) {
    %c0_i32 = arith.constant 0 : i32
    return %arg0, %arg1 : i32, i32
  }
  func.func @transform_2(%arg0: i32, %arg1: i32) -> (i32, i32) {
    %c0_i32 = arith.constant 0 : i32
    return %arg0, %arg1 : i32, i32
  }
}

</mosaic_0001>

<llo_original>
// kernel: tpu_custom_call.1
$region0: #{tpu_custom_call.1}
  #allocation0 [shape = 'u32[]', space=smem, size = 0x4, offset = 0x4, fixed_abs, tag = 'smem constant byte address 0x4 - core index']
  #allocation1 [shape = 'u32[144,128]{1,0:T(1,128)}', space=vmem, size = 0x12000, scoped, tag = 'internal scratch']
  %s0 = inlined_call_operand.hbm [shape: f32[5], index: 0, kind: input, shape index: {}]
  %s1 = inlined_call_operand.vmem [shape: s8[8,8], index: 1, kind: input, shape index: {}]
  %s2 = inlined_call_operand.hbm [shape: f32[8,8], index: 2, kind: output, shape index: {}]
  %s3 = sld [smem:[#allocation0]]
  $region22: #{tpu_custom_call.1} parent=0
    _
  %s5 = ssub.s32 1, %s3
  %s6 = scalar_select 0, %s5, %s3
  $region1: #{tpu_custom_call.1} parent=0
    #allocation2 [shape = 'u8[512]{0}', space=smem, size = 0x200, scoped, tag = 'input window, operand 0, single buffered']
    #allocation3 [shape = 's32[1]{0}', space=sflag, size = 0x4, scoped, tag = 'scoped memory for tpu_custom_call.1']
    #allocation4 [shape = 's32[1]{0}', space=sflag, size = 0x4, scoped, tag = 'scoped memory for tpu_custom_call.1']
    #allocation5 [shape = 'u8[16384]{0}', space=vmem, size = 0x4000, scoped, tag = 'output window, operand 0, single buffered']
    %7 = vsyncpa [#allocation4], 0
    %8 = vsyncpa [#allocation3], 0
    // Predicated region
    $region2: #{tpu_custom_call.1} parent=1 // pred_check
      _
    $region3: #{tpu_custom_call.1} parent=1 // pred_check_branch
      %10 = sbr.rel (0) target = $region5
    $region4: #{tpu_custom_call.1} parent=1 // pred_region
      %s12 = ssub.s32 16, 16
      %13 = vsyncadd [#allocation4], %s12
      %16 = dma.hbm_to_smem %s0, 16, [#allocation2], [#allocation4]
    $region5: #{tpu_custom_call.1} parent=1 // pred_fallthru
      _
    // Predicated region
    $region6: #{tpu_custom_call.1} parent=1 // pred_check
      _
    $region7: #{tpu_custom_call.1} parent=1 // pred_check_branch
      %18 = sbr.rel (0) target = $region9
    $region8: #{tpu_custom_call.1} parent=1 // pred_region
      _
    $region9: #{tpu_custom_call.1} parent=1 // pred_fallthru
      _
    // Predicated region
    $region10: #{tpu_custom_call.1} parent=1 // pred_check
      _
    $region11: #{tpu_custom_call.1} parent=1 // pred_check_branch
      %20 = sbr.rel (0) target = $region13
    $region12: #{tpu_custom_call.1} parent=1 // pred_region
      %21 = dma.done [#allocation4], 16
    $region13: #{tpu_custom_call.1} parent=1 // pred_fallthru
      _
    %22 = sfence
    %v23 = vld [vmem:[%s1] sm:$0x3]
    %v24 = vld [vmem:[%s1 + $0x2] sm:$0x3]
    %v25 = vld [vmem:[%s1 + $0x4] sm:$0x3]
    %v26 = vld [vmem:[%s1 + $0x6] sm:$0x3]
    %v27 = vunpack.c.0.s8 %v23
    %v28 = vunpack.c.0.s8 %v24
    %v29 = vunpack.c.0.s8 %v25
    %v30 = vunpack.c.0.s8 %v26
    %s31 = sld [smem:[#allocation2]]
    %s32 = sld [smem:[#allocation2 + $0x1]]
    %s33 = sld [smem:[#allocation2 + $0x2]]
    %s34 = sld [smem:[#allocation2 + $0x3]]
    %s35 = sld [smem:[#allocation2 + $0x4]]
    %vm36 = vcmp.eq.s32.totalorder %v27, 1
    %vm37 = vcmp.eq.s32.totalorder %v28, 1
    %vm38 = vcmp.eq.s32.totalorder %v29, 1
    %vm39 = vcmp.eq.s32.totalorder %v30, 1
    %v40 = vstv %s31
    %v41 = vsel %vm36, %v40, 0.0
    %v42 = vsel %vm37, %v40, 0.0
    %v43 = vsel %vm38, %v40, 0.0
    %v44 = vsel %vm39, %v40, 0.0
    %vm45 = vcmp.eq.s32.totalorder %v27, 2
    %vm46 = vcmp.eq.s32.totalorder %v28, 2
    %vm47 = vcmp.eq.s32.totalorder %v29, 2
    %vm48 = vcmp.eq.s32.totalorder %v30, 2
    %v49 = vstv %s32
    %v50 = vsel %vm45, %v49, %v41
    %v51 = vsel %vm46, %v49, %v42
    %v52 = vsel %vm47, %v49, %v43
    %v53 = vsel %vm48, %v49, %v44
    %vm54 = vcmp.eq.s32.totalorder %v27, 3
    %vm55 = vcmp.eq.s32.totalorder %v28, 3
    %vm56 = vcmp.eq.s32.totalorder %v29, 3
    %vm57 = vcmp.eq.s32.totalorder %v30, 3
    %v58 = vstv %s33
    %v59 = vsel %vm54, %v58, %v50
    %v60 = vsel %vm55, %v58, %v51
    %v61 = vsel %vm56, %v58, %v52
    %v62 = vsel %vm57, %v58, %v53
    %vm63 = vcmp.eq.s32.totalorder %v27, 4
    %vm64 = vcmp.eq.s32.totalorder %v28, 4
    %vm65 = vcmp.eq.s32.totalorder %v29, 4
    %vm66 = vcmp.eq.s32.totalorder %v30, 4
    %v67 = vstv %s34
    %v68 = vsel %vm63, %v67, %v59
    %v69 = vsel %vm64, %v67, %v60
    %v70 = vsel %vm65, %v67, %v61
    %v71 = vsel %vm66, %v67, %v62
    %vm72 = vcmp.ge.s32.totalorder %v27, 5
    %vm73 = vcmp.ge.s32.totalorder %v28, 5
    %vm74 = vcmp.ge.s32.totalorder %v29, 5
    %vm75 = vcmp.ge.s32.totalorder %v30, 5
    %v76 = vstv %s35
    %v77 = vsel %vm72, %v76, %v68
    %v78 = vsel %vm73, %v76, %v69
    %v79 = vsel %vm74, %v76, %v70
    %v80 = vsel %vm75, %v76, %v71
    %81 = vst [vmem:[#allocation5] sm:$0xff] %v77
    %82 = vst [vmem:[#allocation5 + $0x8] sm:$0xff] %v78
    %83 = vst [vmem:[#allocation5 + $0x10] sm:$0xff] %v79
    %84 = vst [vmem:[#allocation5 + $0x18] sm:$0xff] %v80
    // Predicated region
    $region14: #{tpu_custom_call.1} parent=1 // pred_check
      _
    $region15: #{tpu_custom_call.1} parent=1 // pred_check_branch
      %86 = sbr.rel (0) target = $region17
    $region16: #{tpu_custom_call.1} parent=1 // pred_region
      %s88 = ssub.s32 512, 128
      %89 = vsyncadd [#allocation3], %s88
      %s90 = sshll.u32 [#allocation5], 4
      %s91 = int_to_ptr.vmem [resolvable:$true] %s90
      %96 = dma.vmem_to_hbm [thread:$0]  %s91, 128, %s2, [#allocation3], 128, 128, 8
    $region17: #{tpu_custom_call.1} parent=1 // pred_fallthru
      _
    // Predicated region
    $region18: #{tpu_custom_call.1} parent=1 // pred_check
      _
    $region19: #{tpu_custom_call.1} parent=1 // pred_check_branch
      %98 = sbr.rel (0) target = $region21
    $region20: #{tpu_custom_call.1} parent=1 // pred_region
      %99 = dma.done [#allocation3], 512
    $region21: #{tpu_custom_call.1} parent=1 // pred_fallthru
      _
    %100 = vsyncpa [#allocation3], 1
    %101 = vsyncpa [#allocation4], 1

</llo_original>
